<compile_context>
chip_gen: v5e
topology: v5e:2x2
jax: 0.10.0
libtpu: 0.0.40
codegen_flags: <defaults>
</compile_context>

<pallas_src>
import jax
import jax.numpy as jnp
from jax.experimental import pallas as pl
from jax.experimental.pallas import tpu as pltpu


def _make_linear_sigmoid_kernel(num_features: int):
    def kernel(x_ref, w_ref, b_ref, o_ref):
        # x_ref: (F, TS, TL) VMEM tile, batch on (sublane, lane).
        # w_ref: (F,) f32 in SMEM, b_ref: (1,) f32 in SMEM.
        # o_ref: (TS, TL) sublane/lane-dense output tile.
        acc = x_ref[0].astype(jnp.float32) * w_ref[0]
        for k in range(1, num_features):
            acc = acc + x_ref[k].astype(jnp.float32) * w_ref[k]
        acc = acc + b_ref[0]
        # sigmoid(x) == 0.5 * tanh(0.5 * x) + 0.5  -> one EUP op, exact identity.
        o_ref[...] = (0.5 * jnp.tanh(0.5 * acc) + 0.5).astype(o_ref.dtype)

    return kernel


def linear_sigmoid(x, weight, bias, *, lane_tile: int = 1024,
                   max_sublane_tile: int = 256):
    """x: (B, F), weight: (1, F), bias: (1,) -> (B, 1)   (F == 3 here)."""
    B, F = x.shape
    out_dtype = x.dtype

    TL = lane_tile                        # lanes per row (multiple of 128)
    Bp = ((B + TL - 1) // TL) * TL        # batch padded to whole lane rows only
    R = Bp // TL                          # number of TL-wide rows

    # Sublane tile: multiple of 8, capped so one grid step moves <= ~4 MiB and
    # sized so larger batches still produce several grid steps (v7x megacore).
    if R <= 8:
        TS = R                            # equals full dim -> allowed by (8,128) rule
    else:
        TS = min(max_sublane_tile, max(8, (((R + 3) // 4) // 8) * 8))
    num_tiles = pl.cdiv(R, TS)            # ragged last block handled by Pallas

    # Batch -> lanes.  Pad only the remainder of the last lane row with zeros
    # (padded lanes produce sigmoid(bias) and are sliced off below); the
    # reshape to (F, R, TL) is a free row-major reshape.
    xt = x.T                              # (F, B)
    if Bp != B:
        xt = jnp.pad(xt, ((0, 0), (0, Bp - B)))
    xt3 = xt.reshape(F, R, TL)

    w_flat = weight.astype(jnp.float32).reshape(-1)   # (F,)  -> SMEM
    b_flat = bias.astype(jnp.float32).reshape(-1)     # (1,)  -> SMEM

    out = pl.pallas_call(
        _make_linear_sigmoid_kernel(F),
        out_shape=jax.ShapeDtypeStruct((R, TL), out_dtype),
        grid=(num_tiles,),
        in_specs=[
            # (F, TS, TL) tile of the reshaped input; F equals the full dim.
            pl.BlockSpec((F, TS, TL), lambda i: (0, i, 0)),
            # Weight / bias as SMEM scalars (scalar path, no vector-load slot).
            pl.BlockSpec(memory_space=pltpu.MemorySpace.SMEM),
            pl.BlockSpec(memory_space=pltpu.MemorySpace.SMEM),
        ],
        out_specs=pl.BlockSpec((TS, TL), lambda i: (i, 0)),
        compiler_params=pltpu.CompilerParams(
            dimension_semantics=("parallel",),   # batch steps shard across TCs
            # Allow XLA to fuse the transpose/pad/reshape producer of input 0
            # into the kernel call instead of materialising it in HBM.
            allow_input_fusion=[True, False, False],
        ),
    )(xt3, w_flat, b_flat)

    # Back to the PyTorch layout: reshape is free; slice only if we padded.
    flat = out.reshape(-1)
    if Bp != B:
        flat = flat[:B]
    return flat.reshape(B, 1)


if __name__ == "__main__":
    key = jax.random.PRNGKey(0)
    k_x, k_w, k_b = jax.random.split(key, 3)

    B, IN_F, OUT_F = 4, 3, 1

    # PyTorch-style uniform(-1/sqrt(fan_in), +1/sqrt(fan_in)) init.
    bound = 1.0 / jnp.sqrt(jnp.float32(IN_F))
    weight = jax.random.uniform(k_w, (OUT_F, IN_F), jnp.float32, -bound, bound)
    bias = jax.random.uniform(k_b, (OUT_F,), jnp.float32, -bound, bound)

    def reference(xv):
        return jax.nn.sigmoid(xv @ weight.T + bias)

    # Small shape from the module spec.
    x = jax.random.normal(k_x, (B, IN_F), dtype=jnp.float32)
    out = linear_sigmoid(x, weight, bias)
    jax.block_until_ready(out)
    assert out.shape == (B, OUT_F)
    assert jnp.allclose(out, reference(x), atol=1e-5, rtol=1e-5), (out, reference(x))

    # Also exercise the padded / multi-row and the multi-grid-step paths.
    for big_b in (2500, 40000):
        xb = jax.random.normal(jax.random.fold_in(k_x, big_b), (big_b, IN_F),
                               dtype=jnp.float32)
        ob = linear_sigmoid(xb, weight, bias)
        jax.block_until_ready(ob)
        assert ob.shape == (big_b, OUT_F)
        assert jnp.allclose(ob, reference(xb), atol=1e-5, rtol=1e-5)

    print("KERNEL_OK")
</pallas_src>

<mosaic_0001>
module attributes {stable_mosaic.version = 11 : i64} {
  func.func @kernel(%arg0: i32, %arg1: memref<3x1x1024xf32, #tpu.memory_space<vmem>>, %arg2: memref<3xf32, #tpu.memory_space<smem>>, %arg3: memref<1xf32, #tpu.memory_space<smem>>, %arg4: memref<1x1024xf32, #tpu.memory_space<vmem>>) attributes {dimension_semantics = [#tpu.dimension_semantics<parallel>], iteration_bounds = array<i64: 1>, scalar_prefetch = 0 : i64, scratch_operands = 0 : i64, tpu.core_type = #tpu.core_type<tc>, window_params = [{transform_indices = @transform_0, window_bounds = array<i64: 3, 1, 1024>}, {transform_indices = @transform_1, window_bounds = array<i64: 3>}, {transform_indices = @transform_2, window_bounds = array<i64: 1>}, {transform_indices = @transform_3, window_bounds = array<i64: 1, 1024>}]} {
    %c0 = arith.constant 0 : index
    %c0_0 = arith.constant 0 : index
    %c0_1 = arith.constant 0 : index
    %0 = vector.load %arg1[%c0, %c0_0, %c0_1] : memref<3x1x1024xf32, #tpu.memory_space<vmem>>, vector<1x1x1024xf32>
    %1 = vector.shape_cast %0 : vector<1x1x1024xf32> to vector<1x1024xf32>
    %c0_2 = arith.constant 0 : index
    %2 = memref.load %arg2[%c0_2] : memref<3xf32, #tpu.memory_space<smem>>
    %3 = vector.broadcast %2 : f32 to vector<1x1024xf32>
    %4 = arith.mulf %1, %3 : vector<1x1024xf32>
    %c1 = arith.constant 1 : index
    %c0_3 = arith.constant 0 : index
    %c0_4 = arith.constant 0 : index
    %5 = vector.load %arg1[%c1, %c0_3, %c0_4] : memref<3x1x1024xf32, #tpu.memory_space<vmem>>, vector<1x1x1024xf32>
    %6 = vector.shape_cast %5 : vector<1x1x1024xf32> to vector<1x1024xf32>
    %c1_5 = arith.constant 1 : index
    %7 = memref.load %arg2[%c1_5] : memref<3xf32, #tpu.memory_space<smem>>
    %8 = vector.broadcast %7 : f32 to vector<1x1024xf32>
    %9 = arith.mulf %6, %8 : vector<1x1024xf32>
    %10 = arith.addf %4, %9 : vector<1x1024xf32>
    %c2 = arith.constant 2 : index
    %c0_6 = arith.constant 0 : index
    %c0_7 = arith.constant 0 : index
    %11 = vector.load %arg1[%c2, %c0_6, %c0_7] : memref<3x1x1024xf32, #tpu.memory_space<vmem>>, vector<1x1x1024xf32>
    %12 = vector.shape_cast %11 : vector<1x1x1024xf32> to vector<1x1024xf32>
    %c2_8 = arith.constant 2 : index
    %13 = memref.load %arg2[%c2_8] : memref<3xf32, #tpu.memory_space<smem>>
    %14 = vector.broadcast %13 : f32 to vector<1x1024xf32>
    %15 = arith.mulf %12, %14 : vector<1x1024xf32>
    %16 = arith.addf %10, %15 : vector<1x1024xf32>
    %c0_9 = arith.constant 0 : index
    %17 = memref.load %arg3[%c0_9] : memref<1xf32, #tpu.memory_space<smem>>
    %18 = vector.broadcast %17 : f32 to vector<1x1024xf32>
    %19 = arith.addf %16, %18 : vector<1x1024xf32>
    %cst = arith.constant 5.000000e-01 : f32
    %20 = vector.broadcast %cst : f32 to vector<1x1024xf32>
    %21 = arith.mulf %20, %19 : vector<1x1024xf32>
    %22 = math.tanh %21 : vector<1x1024xf32>
    %cst_10 = arith.constant 5.000000e-01 : f32
    %23 = vector.broadcast %cst_10 : f32 to vector<1x1024xf32>
    %24 = arith.mulf %23, %22 : vector<1x1024xf32>
    %cst_11 = arith.constant 5.000000e-01 : f32
    %25 = vector.broadcast %cst_11 : f32 to vector<1x1024xf32>
    %26 = arith.addf %24, %25 : vector<1x1024xf32>
    %c0_12 = arith.constant 0 : index
    %c0_13 = arith.constant 0 : index
    %27 = vector.load %arg4[%c0_12, %c0_13] : memref<1x1024xf32, #tpu.memory_space<vmem>>, vector<1x1024xf32>
    tpu.vector_store %arg4[%c0_12, %c0_13], %26 {strides = array<i32>} : memref<1x1024xf32, #tpu.memory_space<vmem>>, vector<1x1024xf32>,
    return
  }
  func.func @transform_0(%arg0: i32) -> (i32, i32, i32) {
    %c0_i32 = arith.constant 0 : i32
    %c0_i32_0 = arith.constant 0 : i32
    %c0_i32_1 = arith.constant 0 : i32
    return %c0_i32, %arg0, %c0_i32_0 : i32, i32, i32
  }
  func.func @transform_1(%arg0: i32) -> i32 {
    %c0_i32 = arith.constant 0 : i32
    %c0_i32_0 = arith.constant 0 : i32
    return %c0_i32 : i32
  }
  func.func @transform_2(%arg0: i32) -> i32 {
    %c0_i32 = arith.constant 0 : i32
    %c0_i32_0 = arith.constant 0 : i32
    return %c0_i32 : i32
  }
  func.func @transform_3(%arg0: i32) -> (i32, i32) {
    %c0_i32 = arith.constant 0 : i32
    %c0_i32_0 = arith.constant 0 : i32
    return %arg0, %c0_i32 : i32, i32
  }
}

</mosaic_0001>

<llo_original>
// kernel: tpu_custom_call.1
$region0: #{tpu_custom_call.1}
  #allocation0 [shape = 'u32[]', space=smem, size = 0x4, offset = 0x4, fixed_abs, tag = 'smem constant byte address 0x4 - core index']
  #allocation1 [shape = 'u32[72,128]{1,0:T(1,128)}', space=vmem, size = 0x9000, scoped, tag = 'internal scratch']
  #allocation2 [shape = 'f32[1]{0:T(128)S(6)}', space=smem, size = 0x200, scoped, tag = 'scoped memory for tpu_custom_call.1']
  %s0 = inlined_call_operand.hbm [shape: f32[3,1,1024], index: 0, kind: input, shape index: {}]
  %s1 = inlined_call_operand.vmem [shape: f32[3], index: 1, kind: input, shape index: {}]
  %s2 = inlined_call_operand.<no memory space> [shape: f32[1], index: 2, kind: input, shape index: {}]
  %s3 = inlined_call_operand.hbm [shape: f32[1,1024], index: 3, kind: output, shape index: {}]
  %s4 = sld [smem:[#allocation0]]
  $region30: #{tpu_custom_call.1} parent=0
    _
  %s6 = ssub.s32 1, %s4
  %s7 = scalar_select 0, %s6, %s4
  %8 = sst [smem:[#allocation2]] %s2
  $region1: #{tpu_custom_call.1} parent=0
    #allocation3 [shape = 'u8[12288]{0}', space=vmem, size = 0x3000, scoped, tag = 'input window, operand 0, single buffered']
    #allocation4 [shape = 's32[1]{0}', space=sflag, size = 0x4, scoped, tag = 'scoped memory for tpu_custom_call.1']
    #allocation5 [shape = 's32[1]{0}', space=sflag, size = 0x4, scoped, tag = 'scoped memory for tpu_custom_call.1']
    #allocation6 [shape = 's32[1]{0}', space=sflag, size = 0x4, scoped, tag = 'scoped memory for tpu_custom_call.1']
    #allocation7 [shape = 'u8[512]{0}', space=smem, size = 0x200, scoped, tag = 'input window, operand 1, single buffered']
    #allocation8 [shape = 'u8[4096]{0}', space=vmem, size = 0x1000, scoped, tag = 'output window, operand 0, single buffered']
    %9 = vsyncpa [#allocation4], 0
    %10 = vsyncpa [#allocation6], 0
    %11 = vsyncpa [#allocation5], 0
    // Predicated region
    $region2: #{tpu_custom_call.1} parent=1 // pred_check
      _
    $region3: #{tpu_custom_call.1} parent=1 // pred_check_branch
      %13 = sbr.rel (0) target = $region5
    $region4: #{tpu_custom_call.1} parent=1 // pred_region
      %15 = vsyncadd [#allocation4], 0
      %s16 = sshll.u32 %s0, 4
      %s17 = int_to_ptr.hbm [resolvable:$true] %s16
      %s18 = sshll.u32 [#allocation3], 4
      %s19 = int_to_ptr.vmem [resolvable:$true] %s18
      %24 = dma.hbm_to_vmem [thread:$0]  %s17, 384, %s19, [#allocation4], 128, 128, 8
    $region5: #{tpu_custom_call.1} parent=1 // pred_fallthru
      _
    // Predicated region
    $region6: #{tpu_custom_call.1} parent=1 // pred_check
      _
    $region7: #{tpu_custom_call.1} parent=1 // pred_check_branch
      %26 = sbr.rel (0) target = $region9
    $region8: #{tpu_custom_call.1} parent=1 // pred_region
      %28 = vsyncadd [#allocation6], 0
      %s30 = sshll.u32 %s1, 4
      %s31 = int_to_ptr.vmem [resolvable:$true] %s30
      %33 = dma.vmem_to_smem %s31, 16, [#allocation7], [#allocation6]
    $region9: #{tpu_custom_call.1} parent=1 // pred_fallthru
      _
    // Predicated region
    $region10: #{tpu_custom_call.1} parent=1 // pred_check
      _
    $region11: #{tpu_custom_call.1} parent=1 // pred_check_branch
      %35 = sbr.rel (0) target = $region13
    $region12: #{tpu_custom_call.1} parent=1 // pred_region
      _
    $region13: #{tpu_custom_call.1} parent=1 // pred_fallthru
      _
    // Predicated region
    $region14: #{tpu_custom_call.1} parent=1 // pred_check
      _
    $region15: #{tpu_custom_call.1} parent=1 // pred_check_branch
      %37 = sbr.rel (0) target = $region17
    $region16: #{tpu_custom_call.1} parent=1 // pred_region
      %39 = dma.done [#allocation4], 384
    $region17: #{tpu_custom_call.1} parent=1 // pred_fallthru
      _
    // Predicated region
    $region18: #{tpu_custom_call.1} parent=1 // pred_check
      _
    $region19: #{tpu_custom_call.1} parent=1 // pred_check_branch
      %41 = sbr.rel (0) target = $region21
    $region20: #{tpu_custom_call.1} parent=1 // pred_region
      %43 = dma.done [#allocation6], 16
    $region21: #{tpu_custom_call.1} parent=1 // pred_fallthru
      _
    %44 = sfence
    %v45 = vld [vmem:[#allocation3] sm:$0xff]
    %s46 = sld [smem:[#allocation7]]
    %v47 = vstv %s46
    %v48 = vmul.f32 %v45, %v47
    %s49 = scalar_lea.vmem [#allocation3], 8
    %v50 = vld [vmem:[%s49] sm:$0xff]
    %s51 = sld [smem:[#allocation7 + $0x1]]
    %v52 = vstv %s51
    %v53 = vmul.f32 %v50, %v52
    %v54 = vadd.f32 %v48, %v53
    %s55 = scalar_lea.vmem [#allocation3], 16
    %v56 = vld [vmem:[%s55] sm:$0xff]
    %s57 = sld [smem:[#allocation7 + $0x2]]
    %v58 = vstv %s57
    %v59 = vmul.f32 %v56, %v58
    %v60 = vadd.f32 %v54, %v59
    %s61 = sld [smem:[#allocation2]]
    %v62 = vstv %s61
    %v63 = vadd.f32 %v60, %v62
    %v64 = vmul.f32 %v63, 0.5
    %v65 = vtanh.pop %v64
    %v66 = vmul.f32 %v65, 0.5
    %v67 = vadd.f32 %v66, 0.5
    %68 = vst [vmem:[#allocation8] sm:$0xff] %v67
    // Predicated region
    $region22: #{tpu_custom_call.1} parent=1 // pred_check
      _
    $region23: #{tpu_custom_call.1} parent=1 // pred_check_branch
      %70 = sbr.rel (0) target = $region25
    $region24: #{tpu_custom_call.1} parent=1 // pred_region
      %72 = vsyncadd [#allocation5], 0
      %s74 = sshll.u32 [#allocation8], 4
      %s75 = int_to_ptr.vmem [resolvable:$true] %s74
      %s76 = sshll.u32 %s3, 4
      %s77 = int_to_ptr.hbm [resolvable:$true] %s76
      %79 = dma.vmem_to_hbm [thread:$0]  %s75, 128, %s77, [#allocation5]
    $region25: #{tpu_custom_call.1} parent=1 // pred_fallthru
      _
    // Predicated region
    $region26: #{tpu_custom_call.1} parent=1 // pred_check
      _
    $region27: #{tpu_custom_call.1} parent=1 // pred_check_branch
      %81 = sbr.rel (0) target = $region29
    $region28: #{tpu_custom_call.1} parent=1 // pred_region
      %83 = dma.done [#allocation5], 128
    $region29: #{tpu_custom_call.1} parent=1 // pred_fallthru
      _
    %84 = vsyncpa [#allocation4], 1
    %85 = vsyncpa [#allocation5], 1
    %86 = vsyncpa [#allocation6], 1

</llo_original>
